<compile_context>
chip_gen: v7x
topology: tpu7x:2x2x1
jax: 0.10.0
libtpu: 0.0.40
codegen_flags: <defaults>
</compile_context>

<pallas_src>
import functools

import jax
import jax.numpy as jnp
from jax import lax
from jax.experimental import pallas as pl
from jax.experimental.pallas import tpu as pltpu


def _round_up(x: int, m: int) -> int:
    return ((x + m - 1) // m) * m


# ---------------------------------------------------------------------------
# Kernels
# ---------------------------------------------------------------------------
def _linear_kernel_single_k(a_ref, b_ref, o_ref):
    """Full-K contraction in one MXU pass: no accumulator scratch, no phases.

    a_ref: (tm, K)   activation tile
    b_ref: (tn, K)   weight tile, PyTorch [out, in] layout (no HBM transpose)
    o_ref: (tm, tn)
    """
    o_ref[...] = lax.dot_general(
        a_ref[...],
        b_ref[...],
        dimension_numbers=(((1,), (1,)), ((), ())),  # A @ B.T on the MXU
        preferred_element_type=jnp.float32,
    ).astype(o_ref.dtype)


def _linear_kernel_acc(a_ref, b_ref, o_ref, acc_ref):
    """K split across the innermost grid axis; accumulate in f32 VMEM scratch."""

    @pl.when(pl.program_id(2) == 0)
    def _():
        acc_ref[...] = jnp.zeros_like(acc_ref)

    acc_ref[...] += lax.dot_general(
        a_ref[...],
        b_ref[...],
        dimension_numbers=(((1,), (1,)), ((), ())),
        preferred_element_type=jnp.float32,
    )

    @pl.when(pl.program_id(2) == pl.num_programs(2) - 1)
    def _():
        o_ref[...] = acc_ref[...].astype(o_ref.dtype)


# ---------------------------------------------------------------------------
# Tile selection (trace-time, shapes are static)
# ---------------------------------------------------------------------------
_TILE_VMEM_BUDGET = 24 * 1024 * 1024  # conservative: fits v5e/v6e/v7x scoped VMEM


def _pick_tiles(Mp, Np, Kp, sub, in_bytes, out_bytes, budget=_TILE_VMEM_BUDGET):
    tm_cands = [c for c in (256, 128, 64, 32, 16, 8) if c >= sub and c <= Mp and Mp % c == 0]
    tm = tm_cands[0] if tm_cands else Mp
    tn_cands = [c for c in (1024, 768, 512, 384, 256, 128) if c <= Np and Np % c == 0]
    tk_split_cands = [c for c in (2048, 1024, 512, 256, 128) if c <= Kp and Kp % c == 0]

    def footprint(tm_, tn_, tk_, with_acc):
        # double-buffered input tiles + double-buffered output tile (+ f32 acc)
        need = 2 * (tm_ * tk_ + tn_ * tk_) * in_bytes + 2 * tm_ * tn_ * out_bytes
        if with_acc:
            need += tm_ * tn_ * 4
        return need

    # Preferred: tk == full K (no accumulator, no K grid axis), widest tn.
    for tn in tn_cands:
        need = footprint(tm, tn, Kp, False)
        if need <= budget:
            return tm, tn, Kp, False, need

    # Fallback: split K, accumulate in VMEM scratch.
    for tk in tk_split_cands:
        for tn in tn_cands:
            need = footprint(tm, tn, tk, True)
            if need <= budget:
                return tm, tn, tk, True, need

    # Last resort: minimum legal tiles (always fits).
    tn, tk = 128, 128
    return tm, tn, tk, True, footprint(tm, tn, tk, True)


# ---------------------------------------------------------------------------
# Wrapper: equivalent of nn.Linear(input_dim, output_dim, bias=False)(rep)
# ---------------------------------------------------------------------------
@functools.partial(jax.jit, static_argnames=("cast_to_bf16",))
def linear_head_forward(rep, weight, *, cast_to_bf16=False):
    """rep: [M, K] (batch, input_dim); weight: [N, K] (PyTorch layout). Returns [M, N]."""
    M, K = rep.shape
    N, K2 = weight.shape
    assert K == K2, "input_dim mismatch"

    out_dtype = rep.dtype
    if cast_to_bf16:
        # Optional: halves HBM traffic on the weight; f32 accumulation kept.
        rep = rep.astype(jnp.bfloat16)
        weight = weight.astype(jnp.bfloat16)

    sub = 16 if rep.dtype == jnp.bfloat16 else 8
    Mp = _round_up(M, sub)
    Np = _round_up(N, 128)
    Kp = _round_up(K, 128)

    in_bytes = jnp.dtype(rep.dtype).itemsize
    out_bytes = jnp.dtype(out_dtype).itemsize
    tm, tn, tk, use_acc, need = _pick_tiles(Mp, Np, Kp, sub, in_bytes, out_bytes)

    # Zero-pad to tile-aligned shapes (zeros contribute nothing to the dot).
    if (Mp, Kp) != (M, K):
        rep = jnp.pad(rep, ((0, Mp - M), (0, Kp - K)))
    if (Np, Kp) != (N, K):
        weight = jnp.pad(weight, ((0, Np - N), (0, Kp - K)))

    cost = pl.CostEstimate(
        flops=2 * M * N * K,
        transcendentals=0,
        bytes_accessed=Mp * Kp * in_bytes + Np * Kp * in_bytes + Mp * Np * out_bytes,
    )
    vmem_limit = int(min(max(need + (8 << 20), 32 << 20), 48 << 20))

    if not use_acc:
        # Single K step: gridless-in-K, no accumulator, no phases.
        # N is the OUTER parallel axis: shards across TCs for large-N heads and
        # keeps the (big) weight tile resident across the inner batch-tile loop.
        grid = (Np // tn, Mp // tm)
        out = pl.pallas_call(
            _linear_kernel_single_k,
            out_shape=jax.ShapeDtypeStruct((Mp, Np), out_dtype),
            grid_spec=pltpu.PrefetchScalarGridSpec(
                num_scalar_prefetch=0,
                grid=grid,
                in_specs=[
                    pl.BlockSpec((tm, Kp), lambda j, i: (i, 0)),
                    pl.BlockSpec((tn, Kp), lambda j, i: (j, 0)),
                ],
                out_specs=pl.BlockSpec((tm, tn), lambda j, i: (i, j)),
            ),
            compiler_params=pltpu.CompilerParams(
                dimension_semantics=("parallel", "parallel"),
                vmem_limit_bytes=vmem_limit,
            ),
            cost_estimate=cost,
        )(rep, weight)
    else:
        grid = (Np // tn, Mp // tm, Kp // tk)
        out = pl.pallas_call(
            _linear_kernel_acc,
            out_shape=jax.ShapeDtypeStruct((Mp, Np), out_dtype),
            grid_spec=pltpu.PrefetchScalarGridSpec(
                num_scalar_prefetch=0,
                grid=grid,
                in_specs=[
                    pl.BlockSpec((tm, tk), lambda j, i, k: (i, k)),
                    pl.BlockSpec((tn, tk), lambda j, i, k: (j, k)),
                ],
                out_specs=pl.BlockSpec((tm, tn), lambda j, i, k: (i, j)),
                scratch_shapes=[pltpu.VMEM((tm, tn), jnp.float32)],
            ),
            compiler_params=pltpu.CompilerParams(
                dimension_semantics=("parallel", "parallel", "arbitrary"),
                vmem_limit_bytes=vmem_limit,
            ),
            cost_estimate=cost,
        )(rep, weight)

    if (Mp, Np) != (M, N):
        out = out[:M, :N]
    return out


if __name__ == "__main__":
    # TODO(synk): LinearHead.load/save (torch checkpoint I/O) is host-side and
    # intentionally not translated — only the forward matmul is implemented.
    key = jax.random.PRNGKey(0)
    k1, k2, k3, k4 = jax.random.split(key, 4)

    # --- Small, aligned shapes consistent with LinearHead (single no-bias Linear).
    batch, input_dim, output_dim = 16, 256, 128
    rep = jax.random.normal(k1, (batch, input_dim), dtype=jnp.float32)
    bound = 1.0 / jnp.sqrt(jnp.float32(input_dim))
    weight = jax.random.uniform(
        k2, (output_dim, input_dim), dtype=jnp.float32, minval=-bound, maxval=bound
    )  # PyTorch layout [output_dim, input_dim]

    out = jax.block_until_ready(linear_head_forward(rep, weight))
    ref = rep @ weight.T
    assert out.shape == (batch, output_dim)
    assert jnp.allclose(out, ref, atol=1e-4, rtol=1e-4)

    # --- Non-aligned shapes exercise the padding / partial-tile path.
    b2, in2, out2 = 7, 300, 96
    rep2 = jax.random.normal(k3, (b2, in2), dtype=jnp.float32)
    bound2 = 1.0 / jnp.sqrt(jnp.float32(in2))
    weight2 = jax.random.uniform(
        k4, (out2, in2), dtype=jnp.float32, minval=-bound2, maxval=bound2
    )
    out2_arr = jax.block_until_ready(linear_head_forward(rep2, weight2))
    ref2 = rep2 @ weight2.T
    assert out2_arr.shape == (b2, out2)
    assert jnp.allclose(out2_arr, ref2, atol=1e-4, rtol=1e-4)

    print("KERNEL_OK")
</pallas_src>

<mosaic_0001>
module attributes {stable_mosaic.version = 11 : i64} {
  func.func @_linear_kernel_single_k(%arg0: i32, %arg1: i32, %arg2: memref<16x256xf32, #tpu.memory_space<vmem>>, %arg3: memref<128x256xf32, #tpu.memory_space<vmem>>, %arg4: memref<16x128xf32, #tpu.memory_space<vmem>>) attributes {dimension_semantics = [#tpu.dimension_semantics<parallel>, #tpu.dimension_semantics<parallel>], iteration_bounds = array<i64: 1, 1>, scalar_prefetch = 0 : i64, scratch_operands = 0 : i64, tpu.core_type = #tpu.core_type<tc>, window_params = [{transform_indices = @transform_0, window_bounds = array<i64: 16, 256>}, {transform_indices = @transform_1, window_bounds = array<i64: 128, 256>}, {transform_indices = @transform_2, window_bounds = array<i64: 16, 128>}]} {
    %c0 = arith.constant 0 : index
    %c0_0 = arith.constant 0 : index
    %0 = vector.load %arg2[%c0, %c0_0] : memref<16x256xf32, #tpu.memory_space<vmem>>, vector<16x256xf32>
    %c0_1 = arith.constant 0 : index
    %c0_2 = arith.constant 0 : index
    %1 = vector.load %arg3[%c0_1, %c0_2] : memref<128x256xf32, #tpu.memory_space<vmem>>, vector<128x256xf32>
    %cst = arith.constant dense<0.000000e+00> : vector<16x128xf32>
    %2 = tpu.matmul %0, %1, %cst {dimension_numbers = #tpu.dot_dimension_numbers<[1], [1], [0], [0], [0, 0, 1, 0], [], []>} : vector<16x256xf32>, vector<128x256xf32>, vector<16x128xf32> -> vector<16x128xf32>
    %c0_3 = arith.constant 0 : index
    %c0_4 = arith.constant 0 : index
    %3 = vector.load %arg4[%c0_3, %c0_4] : memref<16x128xf32, #tpu.memory_space<vmem>>, vector<16x128xf32>
    tpu.vector_store %arg4[%c0_3, %c0_4], %2 {strides = array<i32>} : memref<16x128xf32, #tpu.memory_space<vmem>>, vector<16x128xf32>,
    return
  }
  func.func @transform_0(%arg0: i32, %arg1: i32) -> (i32, i32) {
    %c0_i32 = arith.constant 0 : i32
    %c0_i32_0 = arith.constant 0 : i32
    return %arg1, %c0_i32 : i32, i32
  }
  func.func @transform_1(%arg0: i32, %arg1: i32) -> (i32, i32) {
    %c0_i32 = arith.constant 0 : i32
    %c0_i32_0 = arith.constant 0 : i32
    return %arg0, %c0_i32 : i32, i32
  }
  func.func @transform_2(%arg0: i32, %arg1: i32) -> (i32, i32) {
    %c0_i32 = arith.constant 0 : i32
    return %arg1, %arg0 : i32, i32
  }
}

</mosaic_0001>

<llo_original>
// kernel: linear_head_forward.1
$region0: #{linear_head_forward.1}
  #allocation0 [shape = 'u32[]', space=smem, size = 0x4, offset = 0x4, fixed_abs, tag = 'smem constant byte address 0x4 - core index']
  #allocation1 [shape = 'u32[144,128]{1,0:T(1,128)}', space=vmem, size = 0x12000, scoped, tag = 'internal scratch']
  %s0 = inlined_call_operand.hbm [shape: f32[16,256], index: 0, kind: input, shape index: {}]
  %s1 = inlined_call_operand.hbm [shape: f32[128,256], index: 1, kind: input, shape index: {}]
  %s2 = inlined_call_operand.hbm [shape: f32[16,128], index: 2, kind: output, shape index: {}]
  %s3 = sld [smem:[#allocation0]]
  $region26: #{linear_head_forward.1} parent=0
    _
  %s5 = ssub.s32 1, %s3
  %s6 = scalar_select 0, %s5, %s3
  $region1: #{linear_head_forward.1} parent=0
    #allocation2 [shape = 'u8[16384]{0}', space=vmem, size = 0x4000, scoped, tag = 'input window, operand 0, single buffered']
    #allocation3 [shape = 's32[1]{0}', space=sflag, size = 0x4, scoped, tag = 'scoped memory for linear_head_forward.1']
    #allocation4 [shape = 's32[1]{0}', space=sflag, size = 0x4, scoped, tag = 'scoped memory for linear_head_forward.1']
    #allocation5 [shape = 'u8[131072]{0}', space=vmem, size = 0x20000, scoped, tag = 'input window, operand 1, single buffered']
    #allocation6 [shape = 's32[1]{0}', space=sflag, size = 0x4, scoped, tag = 'scoped memory for linear_head_forward.1']
    #allocation7 [shape = 'u8[8192]{0}', space=vmem, size = 0x2000, scoped, tag = 'output window, operand 0, single buffered']
    %7 = vsyncpa [#allocation3], 0
    %8 = vsyncpa [#allocation6], 0
    %9 = vsyncpa [#allocation4], 0
    // Predicated region
    $region2: #{linear_head_forward.1} parent=1 // pred_check
      _
    $region3: #{linear_head_forward.1} parent=1 // pred_check_branch
      %11 = sbr.rel (0) target = $region5
    $region4: #{linear_head_forward.1} parent=1 // pred_region
      %s13 = ssub.s32 512, 512
      %14 = vsyncadd [#allocation3], %s13
      %s15 = sshll.u32 [#allocation2], 4
      %s16 = int_to_ptr.vmem [resolvable:$true] %s15
      %21 = dma.hbm_to_vmem [thread:$0]  %s0, 512, %s16, [#allocation3], 256, 256, 16
    $region5: #{linear_head_forward.1} parent=1 // pred_fallthru
      _
    // Predicated region
    $region6: #{linear_head_forward.1} parent=1 // pred_check
      _
    $region7: #{linear_head_forward.1} parent=1 // pred_check_branch
      %23 = sbr.rel (0) target = $region9
    $region8: #{linear_head_forward.1} parent=1 // pred_region
      %s25 = ssub.s32 4096, 4096
      %26 = vsyncadd [#allocation6], %s25
      %s27 = sshll.u32 [#allocation5], 4
      %s28 = int_to_ptr.vmem [resolvable:$true] %s27
      %33 = dma.hbm_to_vmem [thread:$0]  %s1, 4096, %s28, [#allocation6], 256, 256, 16
    $region9: #{linear_head_forward.1} parent=1 // pred_fallthru
      _
    // Predicated region
    $region10: #{linear_head_forward.1} parent=1 // pred_check
      _
    $region11: #{linear_head_forward.1} parent=1 // pred_check_branch
      %35 = sbr.rel (0) target = $region13
    $region12: #{linear_head_forward.1} parent=1 // pred_region
      %36 = dma.done [#allocation3], 512
    $region13: #{linear_head_forward.1} parent=1 // pred_fallthru
      _
    // Predicated region
    $region14: #{linear_head_forward.1} parent=1 // pred_check
      _
    $region15: #{linear_head_forward.1} parent=1 // pred_check_branch
      %38 = sbr.rel (0) target = $region17
    $region16: #{linear_head_forward.1} parent=1 // pred_region
      %39 = dma.done [#allocation6], 4096
    $region17: #{linear_head_forward.1} parent=1 // pred_fallthru
      _
    %v40 = vld [vmem:[#allocation2] sm:$0xff]
    %v41 = vld [vmem:[#allocation2 + $0x8] sm:$0xff]
    %v42 = vld [vmem:[#allocation2 + $0x10] sm:$0xff]
    %v43 = vld [vmem:[#allocation2 + $0x18] sm:$0xff]
    %v44 = vld [vmem:[#allocation5] sm:$0xff]
    %v45 = vld [vmem:[#allocation5 + $0x8] sm:$0xff]
    %v46 = vld [vmem:[#allocation5 + $0x10] sm:$0xff]
    %v47 = vld [vmem:[#allocation5 + $0x18] sm:$0xff]
    %v48 = vld [vmem:[#allocation5 + $0x20] sm:$0xff]
    %v49 = vld [vmem:[#allocation5 + $0x28] sm:$0xff]
    %v50 = vld [vmem:[#allocation5 + $0x30] sm:$0xff]
    %v51 = vld [vmem:[#allocation5 + $0x38] sm:$0xff]
    %v52 = vld [vmem:[#allocation5 + $0x40] sm:$0xff]
    %v53 = vld [vmem:[#allocation5 + $0x48] sm:$0xff]
    %v54 = vld [vmem:[#allocation5 + $0x50] sm:$0xff]
    %v55 = vld [vmem:[#allocation5 + $0x58] sm:$0xff]
    %v56 = vld [vmem:[#allocation5 + $0x60] sm:$0xff]
    %v57 = vld [vmem:[#allocation5 + $0x68] sm:$0xff]
    %v58 = vld [vmem:[#allocation5 + $0x70] sm:$0xff]
    %v59 = vld [vmem:[#allocation5 + $0x78] sm:$0xff]
    %v60 = vld [vmem:[#allocation5 + $0x80] sm:$0xff]
    %v61 = vld [vmem:[#allocation5 + $0x88] sm:$0xff]
    %v62 = vld [vmem:[#allocation5 + $0x90] sm:$0xff]
    %v63 = vld [vmem:[#allocation5 + $0x98] sm:$0xff]
    %v64 = vld [vmem:[#allocation5 + $0xa0] sm:$0xff]
    %v65 = vld [vmem:[#allocation5 + $0xa8] sm:$0xff]
    %v66 = vld [vmem:[#allocation5 + $0xb0] sm:$0xff]
    %v67 = vld [vmem:[#allocation5 + $0xb8] sm:$0xff]
    %v68 = vld [vmem:[#allocation5 + $0xc0] sm:$0xff]
    %v69 = vld [vmem:[#allocation5 + $0xc8] sm:$0xff]
    %v70 = vld [vmem:[#allocation5 + $0xd0] sm:$0xff]
    %v71 = vld [vmem:[#allocation5 + $0xd8] sm:$0xff]
    %v72 = vld [vmem:[#allocation5 + $0xe0] sm:$0xff]
    %v73 = vld [vmem:[#allocation5 + $0xe8] sm:$0xff]
    %v74 = vld [vmem:[#allocation5 + $0xf0] sm:$0xff]
    %v75 = vld [vmem:[#allocation5 + $0xf8] sm:$0xff]
    %76 = vmatprep.subr.mxu0 %v45
    %77 = vmatpush1.xpose.msra.mxu0 %v44
    %78 = vmatprep.subr.mxu0 %v47
    %79 = vmatpush1.xpose.msra.mxu0 %v46
    %80 = vmatprep.subr.mxu0 %v49
    %81 = vmatpush1.xpose.msra.mxu0 %v48
    %82 = vmatprep.subr.mxu0 %v51
    %83 = vmatpush1.xpose.msra.mxu0 %v50
    %84 = vmatprep.subr.mxu0 %v53
    %85 = vmatpush1.xpose.msra.mxu0 %v52
    %86 = vmatprep.subr.mxu0 %v55
    %87 = vmatpush1.xpose.msra.mxu0 %v54
    %88 = vmatprep.subr.mxu0 %v57
    %89 = vmatpush1.xpose.msra.mxu0 %v56
    %90 = vmatprep.subr.mxu0 %v59
    %91 = vmatpush1.xpose.msra.mxu0 %v58
    %92 = vmatprep.subr.mxu0 %v61
    %93 = vmatpush1.xpose.msra.mxu0 %v60
    %94 = vmatprep.subr.mxu0 %v63
    %95 = vmatpush1.xpose.msra.mxu0 %v62
    %96 = vmatprep.subr.mxu0 %v65
    %97 = vmatpush1.xpose.msra.mxu0 %v64
    %98 = vmatprep.subr.mxu0 %v67
    %99 = vmatpush1.xpose.msra.mxu0 %v66
    %100 = vmatprep.subr.mxu0 %v69
    %101 = vmatpush1.xpose.msra.mxu0 %v68
    %102 = vmatprep.subr.mxu0 %v71
    %103 = vmatpush1.xpose.msra.mxu0 %v70
    %104 = vmatprep.subr.mxu0 %v73
    %105 = vmatpush1.xpose.msra.mxu0 %v72
    %106 = vmatprep.subr.mxu0 %v75
    %107 = vmatpush1.xpose.msra.mxu0 %v74
    %108 = vmatprep.subr.mxu0 0.0
    %109 = vmatpush1.xpose.msra.mxu0 0.0
    %110 = vmatprep.subr.mxu0 0.0
    %111 = vmatpush1.xpose.msra.mxu0 0.0
    %112 = vmatprep.subr.mxu0 0.0
    %113 = vmatpush1.xpose.msra.mxu0 0.0
    %114 = vmatprep.subr.mxu0 0.0
    %115 = vmatpush1.xpose.msra.mxu0 0.0
    %116 = vmatprep.subr.mxu0 0.0
    %117 = vmatpush1.xpose.msra.mxu0 0.0
    %118 = vmatprep.subr.mxu0 0.0
    %119 = vmatpush1.xpose.msra.mxu0 0.0
    %120 = vmatprep.subr.mxu0 0.0
    %121 = vmatpush1.xpose.msra.mxu0 0.0
    %122 = vmatprep.subr.mxu0 0.0
    %123 = vmatpush1.xpose.msra.mxu0 0.0
    %124 = vmatprep.subr.mxu0 0.0
    %125 = vmatpush1.xpose.msra.mxu0 0.0
    %126 = vmatprep.subr.mxu0 0.0
    %127 = vmatpush1.xpose.msra.mxu0 0.0
    %128 = vmatprep.subr.mxu0 0.0
    %129 = vmatpush1.xpose.msra.mxu0 0.0
    %130 = vmatprep.subr.mxu0 0.0
    %131 = vmatpush1.xpose.msra.mxu0 0.0
    %132 = vmatprep.subr.mxu0 0.0
    %133 = vmatpush1.xpose.msra.mxu0 0.0
    %134 = vmatprep.subr.mxu0 0.0
    %135 = vmatpush1.xpose.msra.mxu0 0.0
    %136 = vmatprep.subr.mxu0 0.0
    %137 = vmatpush1.xpose.msra.mxu0 0.0
    %138 = vmatprep.subr.mxu0 0.0
    %139 = vmatpush1.xpose.msra.mxu0 0.0
    %140 = vmatprep.mubr.f32.mxu0 %v41
    %141 = vmatmul.mubr.f32.gmra.mrb[0].mxu0 %v40
    %v142 = vpop.f32.mrb[0].mxu0
    %v143 = vadd.f32 0.0, %v142
    %v144 = vpop.f32.mrb[0].mxu0
    %145 = vmatprep.mubr.f32.mxu0 %v43
    %146 = vmatmul.mubr.f32.gmra.mrb[0].mxu0 %v42
    %v147 = vpop.f32.mrb[0].mxu0
    %v148 = vadd.f32 0.0, %v147
    %v149 = vpop.f32.mrb[0].mxu0
    %150 = vdwg.mxu0
    %151 = vst [vmem:[#allocation7] sm:$0xff] %v143
    %152 = vst [vmem:[#allocation7 + $0x8] sm:$0xff] %v148
    // Predicated region
    $region18: #{linear_head_forward.1} parent=1 // pred_check
      _
    $region19: #{linear_head_forward.1} parent=1 // pred_check_branch
      %154 = sbr.rel (0) target = $region21
    $region20: #{linear_head_forward.1} parent=1 // pred_region
      %s156 = ssub.s32 256, 256
      %157 = vsyncadd [#allocation4], %s156
      %s158 = sshll.u32 [#allocation7], 4
      %s159 = int_to_ptr.vmem [resolvable:$true] %s158
      %164 = dma.vmem_to_hbm [thread:$0]  %s159, 256, %s2, [#allocation4], 128, 128, 8
    $region21: #{linear_head_forward.1} parent=1 // pred_fallthru
      _
    // Predicated region
    $region22: #{linear_head_forward.1} parent=1 // pred_check
      _
    $region23: #{linear_head_forward.1} parent=1 // pred_check_branch
      %166 = sbr.rel (0) target = $region25
    $region24: #{linear_head_forward.1} parent=1 // pred_region
      %167 = dma.done [#allocation4], 256
    $region25: #{linear_head_forward.1} parent=1 // pred_fallthru
      _
    %168 = vsyncpa [#allocation3], 1
    %169 = vsyncpa [#allocation6], 1
    %170 = vsyncpa [#allocation4], 1

</llo_original>
